<compile_context>
chip_gen: v7x
topology: tpu7x:2x2x1
jax: 0.10.0
libtpu: 0.0.40
codegen_flags: <defaults>
</compile_context>

<pallas_src>
import functools

import numpy as np
import jax
import jax.numpy as jnp
from jax.experimental import pallas as pl
from jax.experimental.pallas import tpu as pltpu


def _round_up(x, m):
    return ((x + m - 1) // m) * m


# ---------------------------------------------------------------------------
# Parallel GEMM + bias: (M, K) @ (K, N) + (1, N) -> (M, N)
# Grid = (N-tiles, M-tiles); the weight tile index only changes on the outer
# axis, so each (K, tn) weight block stays resident in VMEM across the row
# loop.  bf16 operands, f32 accumulation, lane-dense (tn % 128 == 0) stores.
# ---------------------------------------------------------------------------
def _matmul_bias_kernel(x_ref, w_ref, b_ref, o_ref):
    acc = jnp.dot(x_ref[...], w_ref[...], preferred_element_type=jnp.float32)
    o_ref[...] = (acc + b_ref[...]).astype(o_ref.dtype)


def matmul_bias(x2d, w, b_row, out_dtype=jnp.float32):
    M, K = x2d.shape
    _, N = w.shape

    # Full row tiles: pad M up instead of falling back to tiny divisors.
    tm = 256 if M >= 256 else _round_up(M, 8)
    Mp = _round_up(M, tm)
    if Mp != M:
        x2d = jnp.pad(x2d, ((0, Mp - M), (0, 0)))

    # Lane-aligned output tile (N is always a multiple of 128 here).
    tn = next(t for t in (512, 256, 128) if N % t == 0)

    ib = np.dtype(x2d.dtype).itemsize
    wb = np.dtype(w.dtype).itemsize
    ob = np.dtype(out_dtype).itemsize
    need = 2 * (tm * K * ib + K * tn * wb + tn * 4 + tm * tn * ob)
    vmem_limit = int(min(max(2 * need + (8 << 20), 32 << 20), 96 << 20))

    out = pl.pallas_call(
        _matmul_bias_kernel,
        out_shape=jax.ShapeDtypeStruct((Mp, N), out_dtype),
        grid_spec=pltpu.PrefetchScalarGridSpec(
            num_scalar_prefetch=0,
            grid=(N // tn, Mp // tm),
            in_specs=[
                pl.BlockSpec((tm, K), lambda j, m: (m, 0)),
                pl.BlockSpec((K, tn), lambda j, m: (0, j)),
                pl.BlockSpec((1, tn), lambda j, m: (0, j)),
            ],
            out_specs=pl.BlockSpec((tm, tn), lambda j, m: (m, j)),
        ),
        compiler_params=pltpu.CompilerParams(
            dimension_semantics=("parallel", "parallel"),
            vmem_limit_bytes=vmem_limit),
    )(x2d, w, b_row)
    return out[:M] if Mp != M else out


# ---------------------------------------------------------------------------
# Sequential LSTM recurrence.  xp_ref already holds X @ W_ih^T + (b_ih + b_hh)
# (bf16, batch-major (tb, TS, 4Hp)); per step only the recurrent matmul +
# elementwise remain:
#   gates_t = xproj_t + h_{t-1} @ W_hh^T   (gate order i, f, g, o)
#   c_t = f*c_{t-1} + i*g ;  h_t = o*tanh(c_t)
# Gate columns are padded to Hp (multiple of 128) so slices are lane-aligned.
# h/c carries live in f32 VMEM scratch; TS steps are fully unrolled; per-step
# hidden states are staged in an f32 scratch and written once per grid step
# as a single lane-dense bf16 block store.
# ---------------------------------------------------------------------------
def _lstm_recurrent_kernel(xp_ref, whh_ref, h0_ref, c0_ref,
                           hall_ref, hn_ref, cn_ref,
                           h_sc, c_sc, hstage_sc, *, ts):
    t = pl.program_id(1)
    Hp = whh_ref.shape[0]
    f32 = jnp.float32

    @pl.when(t == 0)
    def _():
        h_sc[...] = h0_ref[...]
        c_sc[...] = c0_ref[...]

    h = h_sc[...]
    c = c_sc[...]

    # One full-block bf16 load + cast; the unrolled loop only slices values.
    xp_all = xp_ref[...].astype(f32)

    for i in range(ts):
        gates = xp_all[:, i, :] + jnp.dot(
            h.astype(whh_ref.dtype), whh_ref[...],
            preferred_element_type=f32)
        i_g = jax.nn.sigmoid(gates[:, 0 * Hp:1 * Hp])
        f_g = jax.nn.sigmoid(gates[:, 1 * Hp:2 * Hp])
        g_g = jnp.tanh(gates[:, 2 * Hp:3 * Hp])
        o_g = jax.nn.sigmoid(gates[:, 3 * Hp:4 * Hp])
        c = f_g * c + i_g * g_g
        h = o_g * jnp.tanh(c)
        hstage_sc[:, i, :] = h

    h_sc[...] = h
    c_sc[...] = c
    # Single lane-dense bf16 store of the whole (tb, TS, Hp) block.
    hall_ref[...] = hstage_sc[...].astype(hall_ref.dtype)

    @pl.when(t == pl.num_programs(1) - 1)
    def _():
        hn_ref[...] = h
        cn_ref[...] = c


def _run_recurrence(xproj, whh_bf16, h0, c0, *, tb, ts, vmem_limit,
                    single_buffer_consts):
    Bp, T, G = xproj.shape            # G = 4 * Hp
    Hp = whh_bf16.shape[0]
    f32, bf16 = jnp.float32, jnp.bfloat16

    def const_spec(shape, index_map):
        if single_buffer_consts:
            # Constant / rarely-changing blocks: no double buffering.
            return pl.BlockSpec(shape, index_map, pipeline_mode=pl.Buffered(1))
        return pl.BlockSpec(shape, index_map)

    kernel = functools.partial(_lstm_recurrent_kernel, ts=ts)
    return pl.pallas_call(
        kernel,
        out_shape=(
            jax.ShapeDtypeStruct((Bp, T, Hp), bf16),   # h_t for every step
            jax.ShapeDtypeStruct((Bp, Hp), f32),       # final hidden state
            jax.ShapeDtypeStruct((Bp, Hp), f32),       # final cell state
        ),
        grid_spec=pltpu.PrefetchScalarGridSpec(
            num_scalar_prefetch=0,
            grid=(Bp // tb, T // ts),
            in_specs=[
                pl.BlockSpec((tb, ts, G), lambda b, t: (b, t, 0)),   # xproj
                const_spec((Hp, G), lambda b, t: (0, 0)),            # W_hh^T
                const_spec((tb, Hp), lambda b, t: (b, 0)),           # h0
                const_spec((tb, Hp), lambda b, t: (b, 0)),           # c0
            ],
            out_specs=[
                pl.BlockSpec((tb, ts, Hp), lambda b, t: (b, t, 0)),  # h_all
                pl.BlockSpec((tb, Hp), lambda b, t: (b, 0)),         # h_n
                pl.BlockSpec((tb, Hp), lambda b, t: (b, 0)),         # c_n
            ],
            scratch_shapes=[
                pltpu.VMEM((tb, Hp), f32),        # h carry
                pltpu.VMEM((tb, Hp), f32),        # c carry
                pltpu.VMEM((tb, ts, Hp), f32),    # per-block h staging
            ],
        ),
        compiler_params=pltpu.CompilerParams(
            dimension_semantics=("parallel", "arbitrary"),
            vmem_limit_bytes=vmem_limit),
    )(xproj, whh_bf16, h0, c0)


def _pick_ts(T, ts_cap):
    # Prefer sublane-friendly unrolls (multiple of 8, or all of T).
    for d in range(ts_cap, 0, -1):
        if T % d == 0 and (d % 8 == 0 or d == T):
            return d
    for d in range(ts_cap, 0, -1):
        if T % d == 0:
            return d
    return 1


def nlp_forward(token_ids, hidden, params):
    """Pallas equivalent of NLP.forward.

    token_ids: (B, T) int32
    hidden: tuple (h0, c0), each (1, B, H) float32  (num_layers=1)
    returns: (y_pred (B, T, V) float32, (h_n (1, B, H), c_n (1, B, H)))
    """
    emb_table = params["embedding"]          # (V, E)
    w_ih = params["w_ih"]                    # (4H, E)  PyTorch layout
    w_hh = params["w_hh"]                    # (4H, H)
    b_ih = params["b_ih"]                    # (4H,)
    b_hh = params["b_hh"]                    # (4H,)
    w_out = params["w_out"]                  # (V, H)
    b_out = params["b_out"]                  # (V,)

    B, T = token_ids.shape
    V, E = emb_table.shape
    H = w_hh.shape[1]
    f32, bf16 = jnp.float32, jnp.bfloat16

    Bp = _round_up(max(B, 8), 8)             # sublane-aligned batch
    Hp = _round_up(max(H, 128), 128)         # lane-aligned gate/hidden columns
    Vp = _round_up(max(V, 128), 128)         # lane-dense logits columns

    # ---- glue (plain JAX): embedding gather; everything stays batch-major ---
    # TODO(synk): the embedding gather (nn.Embedding lookup) stays in XLA.
    emb = jnp.take(emb_table, token_ids, axis=0).astype(f32)     # (B, T, E)
    emb = jnp.pad(emb, ((0, Bp - B), (0, 0), (0, 0)))             # (Bp, T, E)

    # Gate-block-padded weights (each gate owns an Hp-wide lane-aligned slab).
    wih_tp = jnp.pad(jnp.transpose(w_ih).astype(f32).reshape(E, 4, H),
                     ((0, 0), (0, 0), (0, Hp - H))).reshape(E, 4 * Hp)
    whh_tp = jnp.pad(jnp.transpose(w_hh).astype(f32).reshape(H, 4, H),
                     ((0, Hp - H), (0, 0), (0, Hp - H))).reshape(Hp, 4 * Hp)
    bias_p = jnp.pad((b_ih + b_hh).astype(f32).reshape(4, H),
                     ((0, 0), (0, Hp - H))).reshape(1, 4 * Hp)
    wout_tp = jnp.pad(jnp.transpose(w_out).astype(f32),
                      ((0, Hp - H), (0, Vp - V)))                  # (Hp, Vp)
    bout_p = jnp.pad(b_out.astype(f32), (0, Vp - V)).reshape(1, Vp)

    h0 = jnp.pad(hidden[0][0].astype(f32), ((0, Bp - B), (0, Hp - H)))
    c0 = jnp.pad(hidden[1][0].astype(f32), ((0, Bp - B), (0, Hp - H)))

    # ---- 1) hoisted input projection for ALL timesteps (parallel GEMM) ------
    xproj = matmul_bias(emb.reshape(Bp * T, E).astype(bf16),
                        wih_tp.astype(bf16), bias_p, out_dtype=bf16)
    xproj = xproj.reshape(Bp, T, 4 * Hp)

    # ---- 2) sequential recurrence --------------------------------------------
    # Batch tile: >= 2 tiles when possible so v7x megacore can split the
    # parallel batch axis across its two TensorCores.
    tb = Bp // 2 if Bp % 16 == 0 else Bp
    # Timestep unroll TS: clamp by a VMEM budget, cap at 16.
    per_ts = (2 * tb * 4 * Hp * 2      # xproj blocks (bf16, double-buffered)
              + tb * 4 * Hp * 4        # in-kernel f32 copy of the xproj block
              + 2 * tb * Hp * 2        # h_all out blocks (bf16, double-buffered)
              + tb * Hp * 4)           # f32 staging scratch
    ts_cap = max(1, min(int((16 << 20) // per_ts), 16, T))
    TS = _pick_ts(T, ts_cap)

    rec_need = (2 * tb * TS * 4 * Hp * 2     # xproj in blocks
                + tb * TS * 4 * Hp * 4       # f32 copy of xproj block
                + 2 * tb * TS * Hp * 2       # h_all out blocks
                + Hp * 4 * Hp * 2            # W_hh^T (single buffer)
                + 2 * tb * Hp * 4            # h0 + c0
                + 2 * 2 * tb * Hp * 4        # h_n + c_n out blocks
                + 2 * tb * Hp * 4            # h/c carry scratch
                + tb * TS * Hp * 4)          # staging scratch
    rec_vmem = int(min(max(rec_need + (16 << 20), 32 << 20), 96 << 20))

    whh_bf16 = whh_tp.astype(bf16)
    try:
        h_all, h_last, c_last = _run_recurrence(
            xproj, whh_bf16, h0, c0, tb=tb, ts=TS, vmem_limit=rec_vmem,
            single_buffer_consts=True)
    except Exception:
        # Fallback if pipeline_mode / Buffered(1) is unsupported by the
        # local toolchain: identical kernel, default double buffering.
        h_all, h_last, c_last = _run_recurrence(
            xproj, whh_bf16, h0, c0, tb=tb, ts=TS, vmem_limit=rec_vmem,
            single_buffer_consts=False)

    # ---- 3) deferred vocab projection (parallel GEMM, already batch-first) --
    logits = matmul_bias(h_all.reshape(Bp * T, Hp),
                         wout_tp.astype(bf16), bout_p, out_dtype=f32)
    y_pred = logits.reshape(Bp, T, Vp)[:B, :, :V]      # (B, T, V) - no transpose

    h_n = h_last[:B, :H][None]                         # (1, B, H)
    c_n = c_last[:B, :H][None]                         # (1, B, H)
    return y_pred, (h_n, c_n)


# ---------------------------------------------------------------------------
# Pure-JAX reference (mirrors torch.nn.LSTM math) for a correctness check.
# ---------------------------------------------------------------------------
def _reference_forward(token_ids, hidden, params):
    emb = jnp.take(params["embedding"], token_ids, axis=0)       # (B, T, E)
    w_ih, w_hh = params["w_ih"], params["w_hh"]
    b = params["b_ih"] + params["b_hh"]
    H = w_hh.shape[1]
    h, c = hidden[0][0], hidden[1][0]
    hs = []
    for t in range(token_ids.shape[1]):
        g = emb[:, t, :] @ w_ih.T + h @ w_hh.T + b
        i_g = jax.nn.sigmoid(g[:, 0:H])
        f_g = jax.nn.sigmoid(g[:, H:2 * H])
        g_g = jnp.tanh(g[:, 2 * H:3 * H])
        o_g = jax.nn.sigmoid(g[:, 3 * H:4 * H])
        c = f_g * c + i_g * g_g
        h = o_g * jnp.tanh(c)
        hs.append(h)
    hs = jnp.stack(hs, axis=1)                                   # (B, T, H)
    y = hs @ params["w_out"].T + params["b_out"]
    return y, (h[None], c[None])


def init_params(key, input_dim, embedding_dim, rnn_units):
    V, E, H = input_dim, embedding_dim, rnn_units
    keys = jax.random.split(key, 7)
    scale = 0.1
    return {
        "embedding": scale * jax.random.normal(keys[0], (V, E), jnp.float32),
        "w_ih": scale * jax.random.normal(keys[1], (4 * H, E), jnp.float32),
        "w_hh": scale * jax.random.normal(keys[2], (4 * H, H), jnp.float32),
        "b_ih": scale * jax.random.normal(keys[3], (4 * H,), jnp.float32),
        "b_hh": scale * jax.random.normal(keys[4], (4 * H,), jnp.float32),
        "w_out": scale * jax.random.normal(keys[5], (V, H), jnp.float32),
        "b_out": scale * jax.random.normal(keys[6], (V,), jnp.float32),
    }


if __name__ == "__main__":
    # Small shapes: vocab=20, batch=2, seq=8, embedding=32, hidden=64
    input_dim = 20
    embedding_dim = 32
    rnn_units = 64
    B, T = 2, 8

    key = jax.random.PRNGKey(0)
    k_tok, k_par = jax.random.split(key)
    token_ids = jax.random.randint(k_tok, (B, T), 0, input_dim, dtype=jnp.int32)
    params = init_params(k_par, input_dim, embedding_dim, rnn_units)

    # init_hidden equivalent
    h0 = jnp.zeros((1, B, rnn_units), jnp.float32)
    c0 = jnp.zeros((1, B, rnn_units), jnp.float32)

    y_pred, (h_n, c_n) = nlp_forward(token_ids, (h0, c0), params)
    jax.block_until_ready((y_pred, h_n, c_n))

    assert y_pred.shape == (B, T, input_dim)
    assert h_n.shape == (1, B, rnn_units) and c_n.shape == (1, B, rnn_units)

    # Numerical sanity check vs the pure-JAX reference (bf16 intermediates ->
    # loose tolerance).
    y_ref, (h_ref, c_ref) = _reference_forward(token_ids, (h0, c0), params)
    assert float(jnp.max(jnp.abs(y_pred - y_ref))) < 5e-2
    assert float(jnp.max(jnp.abs(h_n - h_ref))) < 5e-2
    assert float(jnp.max(jnp.abs(c_n - c_ref))) < 5e-2

    print("KERNEL_OK")
</pallas_src>

<mosaic_0001>
module attributes {stable_mosaic.version = 11 : i64} {
  func.func @_matmul_bias_kernel(%arg0: i32, %arg1: i32, %arg2: memref<64x32xbf16, #tpu.memory_space<vmem>>, %arg3: memref<32x512xbf16, #tpu.memory_space<vmem>>, %arg4: memref<1x512xf32, #tpu.memory_space<vmem>>, %arg5: memref<64x512xbf16, #tpu.memory_space<vmem>>) attributes {dimension_semantics = [#tpu.dimension_semantics<parallel>, #tpu.dimension_semantics<parallel>], iteration_bounds = array<i64: 1, 1>, scalar_prefetch = 0 : i64, scratch_operands = 0 : i64, tpu.core_type = #tpu.core_type<tc>, window_params = [{transform_indices = @transform_0, window_bounds = array<i64: 64, 32>}, {transform_indices = @transform_1, window_bounds = array<i64: 32, 512>}, {transform_indices = @transform_2, window_bounds = array<i64: 1, 512>}, {transform_indices = @transform_3, window_bounds = array<i64: 64, 512>}]} {
    %c0 = arith.constant 0 : index
    %c0_0 = arith.constant 0 : index
    %0 = vector.load %arg2[%c0, %c0_0] : memref<64x32xbf16, #tpu.memory_space<vmem>>, vector<64x32xbf16>
    %c0_1 = arith.constant 0 : index
    %c0_2 = arith.constant 0 : index
    %1 = vector.load %arg3[%c0_1, %c0_2] : memref<32x512xbf16, #tpu.memory_space<vmem>>, vector<32x512xbf16>
    %cst = arith.constant dense<0.000000e+00> : vector<64x512xf32>
    %2 = tpu.matmul %0, %1, %cst {dimension_numbers = #tpu.dot_dimension_numbers<[1], [0], [0], [1], [0, 0, 1, 1], [], []>} : vector<64x32xbf16>, vector<32x512xbf16>, vector<64x512xf32> -> vector<64x512xf32>
    %c0_3 = arith.constant 0 : index
    %c0_4 = arith.constant 0 : index
    %3 = vector.load %arg4[%c0_3, %c0_4] : memref<1x512xf32, #tpu.memory_space<vmem>>, vector<1x512xf32>
    %4 = vector.broadcast %3 : vector<1x512xf32> to vector<64x512xf32>
    %5 = arith.addf %2, %4 : vector<64x512xf32>
    %6 = arith.truncf %5 : vector<64x512xf32> to vector<64x512xbf16>
    %c0_5 = arith.constant 0 : index
    %c0_6 = arith.constant 0 : index
    %7 = vector.load %arg5[%c0_5, %c0_6] : memref<64x512xbf16, #tpu.memory_space<vmem>>, vector<64x512xbf16>
    tpu.vector_store %arg5[%c0_5, %c0_6], %6 {strides = array<i32>} : memref<64x512xbf16, #tpu.memory_space<vmem>>, vector<64x512xbf16>,
    return
  }
  func.func @transform_0(%arg0: i32, %arg1: i32) -> (i32, i32) {
    %c0_i32 = arith.constant 0 : i32
    %c0_i32_0 = arith.constant 0 : i32
    return %arg1, %c0_i32 : i32, i32
  }
  func.func @transform_1(%arg0: i32, %arg1: i32) -> (i32, i32) {
    %c0_i32 = arith.constant 0 : i32
    %c0_i32_0 = arith.constant 0 : i32
    return %c0_i32, %arg0 : i32, i32
  }
  func.func @transform_2(%arg0: i32, %arg1: i32) -> (i32, i32) {
    %c0_i32 = arith.constant 0 : i32
    %c0_i32_0 = arith.constant 0 : i32
    return %c0_i32, %arg0 : i32, i32
  }
  func.func @transform_3(%arg0: i32, %arg1: i32) -> (i32, i32) {
    %c0_i32 = arith.constant 0 : i32
    return %arg1, %arg0 : i32, i32
  }
}

</mosaic_0001>

<llo_original>
// kernel: tpu_custom_call.1
$region0: #{tpu_custom_call.1}
  #allocation0 [shape = 'u32[]', space=smem, size = 0x4, offset = 0x4, fixed_abs, tag = 'smem constant byte address 0x4 - core index']
  #allocation1 [shape = 'u32[144,128]{1,0:T(1,128)}', space=vmem, size = 0x12000, scoped, tag = 'internal scratch']
  %s0 = inlined_call_operand.vmem [shape: bf16[64,32], index: 0, kind: input, shape index: {}]
  %s1 = inlined_call_operand.hbm [shape: bf16[32,512], index: 1, kind: input, shape index: {}]
  %s2 = inlined_call_operand.vmem [shape: f32[1,512], index: 2, kind: input, shape index: {}]
  %s3 = inlined_call_operand.hbm [shape: bf16[64,512], index: 3, kind: output, shape index: {}]
  %s4 = sld [smem:[#allocation0]]
  $region26: #{tpu_custom_call.1} parent=0
    _
  %s6 = ssub.s32 1, %s4
  %s7 = scalar_select 0, %s6, %s4
  $region1: #{tpu_custom_call.1} parent=0
    #allocation2 [shape = 'u8[32768]{0}', space=vmem, size = 0x8000, scoped, tag = 'input window, operand 1, single buffered']
    #allocation3 [shape = 's32[1]{0}', space=sflag, size = 0x4, scoped, tag = 'scoped memory for tpu_custom_call.1']
    #allocation4 [shape = 's32[1]{0}', space=sflag, size = 0x4, scoped, tag = 'scoped memory for tpu_custom_call.1']
    #allocation5 [shape = 'u8[65536]{0}', space=vmem, size = 0x10000, scoped, tag = 'output window, operand 0, single buffered']
    %8 = vsyncpa [#allocation3], 0
    %9 = vsyncpa [#allocation4], 0
    // Predicated region
    $region2: #{tpu_custom_call.1} parent=1 // pred_check
      _
    $region3: #{tpu_custom_call.1} parent=1 // pred_check_branch
      %11 = sbr.rel (0) target = $region5
    $region4: #{tpu_custom_call.1} parent=1 // pred_region
      _
    $region5: #{tpu_custom_call.1} parent=1 // pred_fallthru
      _
    // Predicated region
    $region6: #{tpu_custom_call.1} parent=1 // pred_check
      _
    $region7: #{tpu_custom_call.1} parent=1 // pred_check_branch
      %13 = sbr.rel (0) target = $region9
    $region8: #{tpu_custom_call.1} parent=1 // pred_region
      %s15 = ssub.s32 1024, 1024
      %16 = vsyncadd [#allocation3], %s15
      %s17 = sshll.u32 [#allocation2], 4
      %s18 = int_to_ptr.vmem [resolvable:$true] %s17
      %23 = dma.hbm_to_vmem [thread:$0]  %s1, 1024, %s18, [#allocation3], 256, 256, 16
    $region9: #{tpu_custom_call.1} parent=1 // pred_fallthru
      _
    // Predicated region
    $region10: #{tpu_custom_call.1} parent=1 // pred_check
      _
    $region11: #{tpu_custom_call.1} parent=1 // pred_check_branch
      %25 = sbr.rel (0) target = $region13
    $region12: #{tpu_custom_call.1} parent=1 // pred_region
      _
    $region13: #{tpu_custom_call.1} parent=1 // pred_fallthru
      _
    // Predicated region
    $region14: #{tpu_custom_call.1} parent=1 // pred_check
      _
    $region15: #{tpu_custom_call.1} parent=1 // pred_check_branch
      %27 = sbr.rel (0) target = $region17
    $region16: #{tpu_custom_call.1} parent=1 // pred_region
      %28 = dma.done [#allocation3], 1024
    $region17: #{tpu_custom_call.1} parent=1 // pred_fallthru
      _
    %v30 = vld [vmem:[%s0] sm:$0xf]
    %v31 = vld [vmem:[%s0 + $0x4] sm:$0xf]
    %v32 = vld [vmem:[%s0 + $0x8] sm:$0xf]
    %v33 = vld [vmem:[%s0 + $0xc] sm:$0xf]
    %v34 = vld [vmem:[%s0 + $0x10] sm:$0xf]
    %v35 = vld [vmem:[%s0 + $0x14] sm:$0xf]
    %v36 = vld [vmem:[%s0 + $0x18] sm:$0xf]
    %v37 = vld [vmem:[%s0 + $0x1c] sm:$0xf]
    %v38 = vld [vmem:[#allocation2] sm:$0xff]
    %v39 = vld [vmem:[#allocation2 + $0x8] sm:$0xff]
    %v40 = vld [vmem:[#allocation2 + $0x10] sm:$0xff]
    %v41 = vld [vmem:[#allocation2 + $0x18] sm:$0xff]
    %v42 = vld [vmem:[#allocation2 + $0x20] sm:$0xff]
    %v43 = vld [vmem:[#allocation2 + $0x28] sm:$0xff]
    %v44 = vld [vmem:[#allocation2 + $0x30] sm:$0xff]
    %v45 = vld [vmem:[#allocation2 + $0x38] sm:$0xff]
    %v46 = vld [vmem:[%s2] sm:$0xf]
    %v48 = vlaneseq
    %v49 = vshrl.u32 %v48, 7
    %v50 = vsub.s32 0, %v49
    %v51 = vrot.slane %v46, %v50
    %v52 = vlaneseq
    %v53 = vshrl.u32 %v52, 7
    %v54 = vsub.s32 1, %v53
    %v55 = vrot.slane %v46, %v54
    %v56 = vlaneseq
    %v57 = vshrl.u32 %v56, 7
    %v58 = vsub.s32 2, %v57
    %v59 = vrot.slane %v46, %v58
    %v60 = vlaneseq
    %v61 = vshrl.u32 %v60, 7
    %v62 = vsub.s32 3, %v61
    %v63 = vrot.slane %v46, %v62
    %v76 = vunpack.c.l.b16 %v30
    %v77 = vunpack.c.l.b16 %v31
    %v78 = vunpack.c.l.b16 %v32
    %v79 = vunpack.c.l.b16 %v33
    %v80 = vunpack.c.l.b16 %v34
    %v81 = vunpack.c.l.b16 %v35
    %v82 = vunpack.c.l.b16 %v36
    %v83 = vunpack.c.l.b16 %v37
    %v84 = vpack.c.b16 %v77, %v76
    %v85 = vpack.c.b16 %v79, %v78
    %v86 = vpack.c.b16 %v81, %v80
    %v87 = vpack.c.b16 %v83, %v82
    %v96 = vunpack.c.l.b16 %v38
    %v97 = vunpack.c.h.b16 %v38
    %v98 = vunpack.c.l.b16 %v39
    %v99 = vunpack.c.h.b16 %v39
    %v100 = vunpack.c.l.b16 %v40
    %v101 = vunpack.c.h.b16 %v40
    %v102 = vunpack.c.l.b16 %v41
    %v103 = vunpack.c.h.b16 %v41
    %v104 = vunpack.c.l.b16 %v42
    %v105 = vunpack.c.h.b16 %v42
    %v106 = vunpack.c.l.b16 %v43
    %v107 = vunpack.c.h.b16 %v43
    %v108 = vunpack.c.l.b16 %v44
    %v109 = vunpack.c.h.b16 %v44
    %v110 = vunpack.c.l.b16 %v45
    %v111 = vunpack.c.h.b16 %v45
    %v112 = vpack.c.b16 %v100, %v96
    %v113 = vpack.c.b16 %v101, %v97
    %v114 = vpack.c.b16 %v102, %v98
    %v115 = vpack.c.b16 %v103, %v99
    %v116 = vpack.c.b16 %v108, %v104
    %v117 = vpack.c.b16 %v109, %v105
    %v118 = vpack.c.b16 %v110, %v106
    %v119 = vpack.c.b16 %v111, %v107
    %vm128 = vcmask 261120
    %v130 = vsel %vm128, %v84, 0
    %v133 = vsel %vm128, %v85, 0
    %v136 = vsel %vm128, %v86, 0
    %v139 = vsel %vm128, %v87, 0
    %141 = vmatprep.subr.bf16.mxu0 %v113
    %142 = vmatpush1.bf16.msra.mxu0 %v112
    %143 = vmatprep.subr.bf16.mxu0 %v117
    %144 = vmatpush1.bf16.msra.mxu0 %v116
    %145 = vmatprep.subr.bf16.mxu0 0
    %146 = vmatpush1.bf16.msra.mxu0 0
    %147 = vmatprep.subr.bf16.mxu0 0
    %148 = vmatpush1.bf16.msra.mxu0 0
    %149 = vmatprep.subr.bf16.mxu0 0
    %150 = vmatpush1.bf16.msra.mxu0 0
    %151 = vmatprep.subr.bf16.mxu0 0
    %152 = vmatpush1.bf16.msra.mxu0 0
    %153 = vmatprep.subr.bf16.mxu0 0
    %154 = vmatpush1.bf16.msra.mxu0 0
    %155 = vmatprep.subr.bf16.mxu0 0
    %156 = vmatpush1.bf16.msra.mxu0 0
    %157 = vmatprep.subr.bf16.mxu0 0
    %158 = vmatpush1.bf16.msra.mxu0 0
    %159 = vmatprep.subr.bf16.mxu0 0
    %160 = vmatpush1.bf16.msra.mxu0 0
    %161 = vmatprep.subr.bf16.mxu0 0
    %162 = vmatpush1.bf16.msra.mxu0 0
    %163 = vmatprep.subr.bf16.mxu0 0
    %164 = vmatpush1.bf16.msra.mxu0 0
    %165 = vmatprep.subr.bf16.mxu0 0
    %166 = vmatpush1.bf16.msra.mxu0 0
    %167 = vmatprep.subr.bf16.mxu0 0
    %168 = vmatpush1.bf16.msra.mxu0 0
    %169 = vmatprep.subr.bf16.mxu0 0
    %170 = vmatpush1.bf16.msra.mxu0 0
    %171 = vmatprep.subr.bf16.mxu0 0
    %172 = vmatpush1.bf16.msra.mxu0 0
    %173 = vmatprep.mubr.bf16.mxu0 0
    %174 = vmatmul.mubr.bf16.gmra.mrb[0].mxu0 %v130
    %v175 = vpop.f32.mrb[0].mxu0
    %v176 = vadd.f32 %v51, %v175
    %v177 = vpop.f32.mrb[0].mxu0
    %v178 = vadd.f32 %v55, %v177
    %v179 = vpop.f32.mrb[0].mxu0
    %v180 = vadd.f32 %v51, %v179
    %v181 = vpop.f32.mrb[0].mxu0
    %v182 = vadd.f32 %v55, %v181
    %183 = vmatprep.mubr.bf16.mxu0 0
    %184 = vmatmul.mubr.bf16.gmra.mrb[0].mxu0 %v133
    %v185 = vpop.f32.mrb[0].mxu0
    %v186 = vadd.f32 %v51, %v185
    %v187 = vpop.f32.mrb[0].mxu0
    %v188 = vadd.f32 %v55, %v187
    %v189 = vpop.f32.mrb[0].mxu0
    %v190 = vadd.f32 %v51, %v189
    %v191 = vpop.f32.mrb[0].mxu0
    %v192 = vadd.f32 %v55, %v191
    %193 = vmatprep.mubr.bf16.mxu0 0
    %194 = vmatmul.mubr.bf16.gmra.mrb[0].mxu0 %v136
    %v195 = vpop.f32.mrb[0].mxu0
    %v196 = vadd.f32 %v51, %v195
    %v197 = vpop.f32.mrb[0].mxu0
    %v198 = vadd.f32 %v55, %v197
    %v199 = vpop.f32.mrb[0].mxu0
    %v200 = vadd.f32 %v51, %v199
    %v201 = vpop.f32.mrb[0].mxu0
    %v202 = vadd.f32 %v55, %v201
    %203 = vmatprep.mubr.bf16.mxu0 0
    %204 = vmatmul.mubr.bf16.gmra.mrb[0].mxu0 %v139
    %v205 = vpop.f32.mrb[0].mxu0
    %v206 = vadd.f32 %v51, %v205
    %v207 = vpop.f32.mrb[0].mxu0
    %v208 = vadd.f32 %v55, %v207
    %v209 = vpop.f32.mrb[0].mxu0
    %v210 = vadd.f32 %v51, %v209
    %v211 = vpop.f32.mrb[0].mxu0
    %v212 = vadd.f32 %v55, %v211
    %213 = vdwg.mxu0
    %214 = vmatprep.subr.bf16.mxu0 %v115
    %215 = vmatpush1.bf16.msra.mxu0 %v114
    %216 = vmatprep.subr.bf16.mxu0 %v119
    %217 = vmatpush1.bf16.msra.mxu0 %v118
    %218 = vmatprep.subr.bf16.mxu0 0
    %219 = vmatpush1.bf16.msra.mxu0 0
    %220 = vmatprep.subr.bf16.mxu0 0
    %221 = vmatpush1.bf16.msra.mxu0 0
    %222 = vmatprep.subr.bf16.mxu0 0
    %223 = vmatpush1.bf16.msra.mxu0 0
    %224 = vmatprep.subr.bf16.mxu0 0
    %225 = vmatpush1.bf16.msra.mxu0 0
    %226 = vmatprep.subr.bf16.mxu0 0
    %227 = vmatpush1.bf16.msra.mxu0 0
    %228 = vmatprep.subr.bf16.mxu0 0
    %229 = vmatpush1.bf16.msra.mxu0 0
    %230 = vmatprep.subr.bf16.mxu0 0
    %231 = vmatpush1.bf16.msra.mxu0 0
    %232 = vmatprep.subr.bf16.mxu0 0
    %233 = vmatpush1.bf16.msra.mxu0 0
    %234 = vmatprep.subr.bf16.mxu0 0
    %235 = vmatpush1.bf16.msra.mxu0 0
    %236 = vmatprep.subr.bf16.mxu0 0
    %237 = vmatpush1.bf16.msra.mxu0 0
    %238 = vmatprep.subr.bf16.mxu0 0
    %239 = vmatpush1.bf16.msra.mxu0 0
    %240 = vmatprep.subr.bf16.mxu0 0
    %241 = vmatpush1.bf16.msra.mxu0 0
    %242 = vmatprep.subr.bf16.mxu0 0
    %243 = vmatpush1.bf16.msra.mxu0 0
    %244 = vmatprep.subr.bf16.mxu0 0
    %245 = vmatpush1.bf16.msra.mxu0 0
    %246 = vmatprep.mubr.bf16.mxu0 0
    %247 = vmatmul.mubr.bf16.gmra.mrb[0].mxu0 %v130
    %v248 = vpop.f32.mrb[0].mxu0
    %v249 = vadd.f32 %v59, %v248
    %v250 = vpop.f32.mrb[0].mxu0
    %v251 = vadd.f32 %v63, %v250
    %v252 = vpop.f32.mrb[0].mxu0
    %v253 = vadd.f32 %v59, %v252
    %v254 = vpop.f32.mrb[0].mxu0
    %v255 = vadd.f32 %v63, %v254
    %256 = vmatprep.mubr.bf16.mxu0 0
    %257 = vmatmul.mubr.bf16.gmra.mrb[0].mxu0 %v133
    %v258 = vpop.f32.mrb[0].mxu0
    %v259 = vadd.f32 %v59, %v258
    %v260 = vpop.f32.mrb[0].mxu0
    %v261 = vadd.f32 %v63, %v260
    %v262 = vpop.f32.mrb[0].mxu0
    %v263 = vadd.f32 %v59, %v262
    %v264 = vpop.f32.mrb[0].mxu0
    %v265 = vadd.f32 %v63, %v264
    %266 = vmatprep.mubr.bf16.mxu0 0
    %267 = vmatmul.mubr.bf16.gmra.mrb[0].mxu0 %v136
    %v268 = vpop.f32.mrb[0].mxu0
    %v269 = vadd.f32 %v59, %v268
    %v270 = vpop.f32.mrb[0].mxu0
    %v271 = vadd.f32 %v63, %v270
    %v272 = vpop.f32.mrb[0].mxu0
    %v273 = vadd.f32 %v59, %v272
    %v274 = vpop.f32.mrb[0].mxu0
    %v275 = vadd.f32 %v63, %v274
    %276 = vmatprep.mubr.bf16.mxu0 0
    %277 = vmatmul.mubr.bf16.gmra.mrb[0].mxu0 %v139
    %v278 = vpop.f32.mrb[0].mxu0
    %v279 = vadd.f32 %v59, %v278
    %v280 = vpop.f32.mrb[0].mxu0
    %v281 = vadd.f32 %v63, %v280
    %v282 = vpop.f32.mrb[0].mxu0
    %v283 = vadd.f32 %v59, %v282
    %v284 = vpop.f32.mrb[0].mxu0
    %v285 = vadd.f32 %v63, %v284
    %286 = vdwg.mxu0
    %v287 = vpack.c.bf16 %v180, %v176
    %v288 = vpack.c.bf16 %v182, %v178
    %v289 = vpack.c.bf16 %v253, %v249
    %v290 = vpack.c.bf16 %v255, %v251
    %v291 = vpack.c.bf16 %v190, %v186
    %v292 = vpack.c.bf16 %v192, %v188
    %v293 = vpack.c.bf16 %v263, %v259
    %v294 = vpack.c.bf16 %v265, %v261
    %v295 = vpack.c.bf16 %v200, %v196
    %v296 = vpack.c.bf16 %v202, %v198
    %v297 = vpack.c.bf16 %v273, %v269
    %v298 = vpack.c.bf16 %v275, %v271
    %v299 = vpack.c.bf16 %v210, %v206
    %v300 = vpack.c.bf16 %v212, %v208
    %v301 = vpack.c.bf16 %v283, %v279
    %v302 = vpack.c.bf16 %v285, %v281
    %v319 = vunpack.c.l.b16 %v287
    %v320 = vunpack.c.l.b16 %v288
    %v321 = vunpack.c.l.b16 %v289
    %v322 = vunpack.c.l.b16 %v290
    %v323 = vunpack.c.h.b16 %v287
    %v324 = vunpack.c.h.b16 %v288
    %v325 = vunpack.c.h.b16 %v289
    %v326 = vunpack.c.h.b16 %v290
    %v327 = vunpack.c.l.b16 %v291
    %v328 = vunpack.c.l.b16 %v292
    %v329 = vunpack.c.l.b16 %v293
    %v330 = vunpack.c.l.b16 %v294
    %v331 = vunpack.c.h.b16 %v291
    %v332 = vunpack.c.h.b16 %v292
    %v333 = vunpack.c.h.b16 %v293
    %v334 = vunpack.c.h.b16 %v294
    %v335 = vunpack.c.l.b16 %v295
    %v336 = vunpack.c.l.b16 %v296
    %v337 = vunpack.c.l.b16 %v297
    %v338 = vunpack.c.l.b16 %v298
    %v339 = vunpack.c.h.b16 %v295
    %v340 = vunpack.c.h.b16 %v296
    %v341 = vunpack.c.h.b16 %v297
    %v342 = vunpack.c.h.b16 %v298
    %v343 = vunpack.c.l.b16 %v299
    %v344 = vunpack.c.l.b16 %v300
    %v345 = vunpack.c.l.b16 %v301
    %v346 = vunpack.c.l.b16 %v302
    %v347 = vunpack.c.h.b16 %v299
    %v348 = vunpack.c.h.b16 %v300
    %v349 = vunpack.c.h.b16 %v301
    %v350 = vunpack.c.h.b16 %v302
    %v351 = vpack.c.b16 %v320, %v319
    %v352 = vpack.c.b16 %v322, %v321
    %v353 = vpack.c.b16 %v324, %v323
    %v354 = vpack.c.b16 %v326, %v325
    %v355 = vpack.c.b16 %v328, %v327
    %v356 = vpack.c.b16 %v330, %v329
    %v357 = vpack.c.b16 %v332, %v331
    %v358 = vpack.c.b16 %v334, %v333
    %v359 = vpack.c.b16 %v336, %v335
    %v360 = vpack.c.b16 %v338, %v337
    %v361 = vpack.c.b16 %v340, %v339
    %v362 = vpack.c.b16 %v342, %v341
    %v363 = vpack.c.b16 %v344, %v343
    %v364 = vpack.c.b16 %v346, %v345
    %v365 = vpack.c.b16 %v348, %v347
    %v366 = vpack.c.b16 %v350, %v349
    %383 = vst [vmem:[#allocation5] sm:$0xff] %v351
    %384 = vst [vmem:[#allocation5 + $0x8] sm:$0xff] %v352
    %385 = vst [vmem:[#allocation5 + $0x10] sm:$0xff] %v353
    %386 = vst [vmem:[#allocation5 + $0x18] sm:$0xff] %v354
    %387 = vst [vmem:[#allocation5 + $0x20] sm:$0xff] %v355
    %388 = vst [vmem:[#allocation5 + $0x28] sm:$0xff] %v356
    %389 = vst [vmem:[#allocation5 + $0x30] sm:$0xff] %v357
    %390 = vst [vmem:[#allocation5 + $0x38] sm:$0xff] %v358
    %391 = vst [vmem:[#allocation5 + $0x40] sm:$0xff] %v359
    %392 = vst [vmem:[#allocation5 + $0x48] sm:$0xff] %v360
    %393 = vst [vmem:[#allocation5 + $0x50] sm:$0xff] %v361
    %394 = vst [vmem:[#allocation5 + $0x58] sm:$0xff] %v362
    %395 = vst [vmem:[#allocation5 + $0x60] sm:$0xff] %v363
    %396 = vst [vmem:[#allocation5 + $0x68] sm:$0xff] %v364
    %397 = vst [vmem:[#allocation5 + $0x70] sm:$0xff] %v365
    %398 = vst [vmem:[#allocation5 + $0x78] sm:$0xff] %v366
    // Predicated region
    $region18: #{tpu_custom_call.1} parent=1 // pred_check
      _
    $region19: #{tpu_custom_call.1} parent=1 // pred_check_branch
      %400 = sbr.rel (0) target = $region21
    $region20: #{tpu_custom_call.1} parent=1 // pred_region
      %s402 = ssub.s32 2048, 2048
      %403 = vsyncadd [#allocation4], %s402
      %s404 = sshll.u32 [#allocation5], 4
      %s405 = int_to_ptr.vmem [resolvable:$true] %s404
      %410 = dma.vmem_to_hbm [thread:$0]  %s405, 2048, %s3, [#allocation4], 256, 256, 16
    $region21: #{tpu_custom_call.1} parent=1 // pred_fallthru
      _
    // Predicated region
    $region22: #{tpu_custom_call.1} parent=1 // pred_check
      _
    $region23: #{tpu_custom_call.1} parent=1 // pred_check_branch
      %412 = sbr.rel (0) target = $region25
    $region24: #{tpu_custom_call.1} parent=1 // pred_region
      %413 = dma.done [#allocation4], 2048
    $region25: #{tpu_custom_call.1} parent=1 // pred_fallthru
      _
    %414 = vsyncpa [#allocation3], 1
    %415 = vsyncpa [#allocation4], 1

</llo_original>
